<compile_context>
chip_gen: v5e
topology: v5e:2x2
jax: 0.10.0
libtpu: 0.0.40
codegen_flags: <defaults>
</compile_context>

<pallas_src>
import functools

import jax
import jax.numpy as jnp
from jax import lax
from jax.experimental import pallas as pl
from jax.experimental.pallas import tpu as pltpu

# Static hyper-params from the module definition.
_KT = 8            # ConvTranspose1d kernel size
_ST = 2            # ConvTranspose1d stride
_PT = 3            # ConvTranspose1d padding
_KC = 9            # Conv1d kernel size
_PC = 4            # Conv1d padding (reflect)
_EPS = 1e-5        # BatchNorm eps
_TAPS = _KT // _ST # polyphase taps per output phase (= 4)
_XPAD = 2          # per-sample zero pad for the polyphase tap windows


# ----------------------------------------------------------------------------
# Fused Pallas kernel: whole UNetUp forward, single program, all operands VMEM.
# ----------------------------------------------------------------------------
def _unet_up_fused_kernel(x_ref, skip_ref, scat_e_ref, scat_o_ref,
                          w_up_e_ref, w_up_o_ref, b_up_ref,
                          w1_ref, g1_ref, be1_ref,
                          w2_ref, g2_ref, be2_ref,
                          o_ref, *, n, lin):
    """x_ref      (Cin, n*(lin+4)+4) bf16  per-sample zero-padded lane slab
       skip_ref   (n, Cs, Ls)        bf16  skip connection
       scat_e/o   (lin, Ls+8)        bf16  0/1 interleave+pad+reflect scatter
       w_up_e/o   (Cin, 4*Cin)       bf16  polyphase ConvTranspose weights
       b_up_ref   (Cin, 1)           f32   ConvTranspose bias
       w1/w2      (Cout, KC*C)       bf16  conv weights (im2col layout)
       g*/be*     (Cout, 1)          f32   BatchNorm affine params
       o_ref      (Cout, n*Ls)       f32   lane-dense output slab
    """
    f32, bf16 = jnp.float32, jnp.bfloat16
    Cs, Ls = skip_ref.shape[1], skip_ref.shape[2]
    Cin = b_up_ref.shape[0]
    Lpp = lin + 2 * _XPAD            # per-sample block length in the x slab
    Lp = Ls + 2 * _PC                # reflect-padded conv input length / sample

    # ---- ConvTranspose1d(k=8, s=2, p=3): polyphase, batched over the slab ---
    #   out[2m]   = sum_i x[m-2+i] * W[7-2i]   (even phase)
    #   out[2m+1] = sum_i x[m-1+i] * W[6-2i]   (odd  phase)
    xs = x_ref[...]                                              # bf16
    rhs_e = jnp.concatenate([xs[:, i:i + n * Lpp] for i in range(_TAPS)], axis=0)
    rhs_o = jnp.concatenate([xs[:, i + 1:i + 1 + n * Lpp] for i in range(_TAPS)],
                            axis=0)
    y_e = jnp.dot(w_up_e_ref[...], rhs_e, preferred_element_type=f32)
    y_o = jnp.dot(w_up_o_ref[...], rhs_o, preferred_element_type=f32)
    # Hoisted bias add + single bf16 cast (these values only feed bf16 matmuls).
    y_e = (y_e + b_up_ref[...]).astype(bf16)                     # (Cin, n*Lpp)
    y_o = (y_o + b_up_ref[...]).astype(bf16)

    scat_e = scat_e_ref[...]                                     # (lin, Lp) bf16
    scat_o = scat_o_ref[...]

    def reflect_cols(m, s, length):
        """Reflect-pad columns [s, s+length) of a bf16 slab by _PC (slices only)."""
        left = [m[:, s + c:s + c + 1] for c in range(_PC, 0, -1)]
        right = [m[:, s + length - 2 - j:s + length - 1 - j] for j in range(_PC)]
        return jnp.concatenate(left + [m[:, s:s + length]] + right, axis=1)

    def conv_block(slab, w, g, be):
        """im2col conv + one-pass train-mode BatchNorm + ReLU -> (Cout, n*Ls) f32."""
        rhs = jnp.concatenate([slab[:, k:k + n * Lp] for k in range(_KC)], axis=0)
        h = jnp.dot(w, rhs, preferred_element_type=f32)          # (Cout, n*Lp)
        # Drop the per-sample reflect-pad overrun lanes -> dense valid slab.
        hv = jnp.concatenate([h[:, i * Lp:i * Lp + Ls] for i in range(n)], axis=1)
        cnt = hv.shape[-1]                                       # n*Ls (N*L stats)
        s1 = jnp.sum(hv, axis=-1, keepdims=True)
        s2 = jnp.sum(hv * hv, axis=-1, keepdims=True)
        mean = s1 / cnt
        var = s2 / cnt - mean * mean
        scale = g * lax.rsqrt(var + _EPS)
        return jnp.maximum(hv * scale + (be - mean * scale), 0.0)

    # ---- conv1 input: per sample [reflect_pad(skip) ; scatter(up phases)] ---
    # The 0/1 scatter does interleave + F.pad(diff) + reflect-pad in one bf16 dot.
    # TODO(synk): replace the scatter dots with strided stores into a VMEM
    # scratch once lane-strided stores are exercised for this layout.
    tail1 = jnp.zeros((Cs + Cin, 2 * _PC), bf16)
    parts = []
    for i in range(n):
        sk = reflect_cols(skip_ref[i], 0, Ls)                    # (Cs, Lp) bf16
        up = (jnp.dot(y_e[:, i * Lpp:i * Lpp + lin], scat_e,
                      preferred_element_type=f32)
              + jnp.dot(y_o[:, i * Lpp:i * Lpp + lin], scat_o,
                        preferred_element_type=f32)).astype(bf16)  # (Cin, Lp)
        parts.append(jnp.concatenate([sk, up], axis=0))          # (Ccat, Lp)
    cat1 = jnp.concatenate(parts + [tail1], axis=1)              # (Ccat, n*Lp+8)

    # conv1 + BN + ReLU  (conv bias omitted: cancels in train-mode BN).
    h1 = conv_block(cat1, w1_ref[...], g1_ref[...], be1_ref[...])  # (Cout, n*Ls)
    h1b = h1.astype(bf16)                                        # cast before copies

    # conv2 + BN + ReLU.
    tail2 = jnp.zeros((h1b.shape[0], 2 * _PC), bf16)
    cat2 = jnp.concatenate([reflect_cols(h1b, i * Ls, Ls) for i in range(n)]
                           + [tail2], axis=1)                    # (Cout, n*Lp+8)
    o_ref[...] = conv_block(cat2, w2_ref[...], g2_ref[...], be2_ref[...])


# ----------------------------------------------------------------------------
# Wrappers
# ----------------------------------------------------------------------------
def prepare_params(params):
    """One-time re-layout of PyTorch-style parameters into kernel operands."""
    up_w = params["up_w"]                         # (Cin, Cin, KT)
    _, cup, kt = up_w.shape
    assert kt == _KT and _ST == 2
    w1, w2 = params["w1"], params["w2"]
    cout, ccat, kc = w1.shape
    bf16 = jnp.bfloat16
    # Polyphase ConvTranspose weights: W[co, i*Cin + ci] = up_w[ci, co, tap_i].
    w_up_e = jnp.transpose(up_w[:, :, _KT - 1::-2], (1, 2, 0)).reshape(cup, -1)
    w_up_o = jnp.transpose(up_w[:, :, _KT - 2::-2], (1, 2, 0)).reshape(cup, -1)
    # im2col conv weights: W[co, k*C + ci] = w[co, ci, k].
    w1_2d = jnp.transpose(w1, (0, 2, 1)).reshape(cout, kc * ccat)
    w2_2d = jnp.transpose(w2, (0, 2, 1)).reshape(cout, kc * cout)
    # Conv biases b1/b2 are intentionally dropped: a per-channel bias added
    # before training-mode BatchNorm cancels exactly (mean subtraction).
    return {
        "w_up_e": w_up_e.astype(bf16), "w_up_o": w_up_o.astype(bf16),
        "b_up": params["up_b"].reshape(cup, 1),
        "w1": w1_2d.astype(bf16),
        "g1": params["g1"].reshape(cout, 1), "be1": params["be1"].reshape(cout, 1),
        "w2": w2_2d.astype(bf16),
        "g2": params["g2"].reshape(cout, 1), "be2": params["be2"].reshape(cout, 1),
    }


def _phase_scatter_mats(lin, ls):
    """0/1 matrices mapping phase outputs -> reflect-padded, F.pad-shifted lanes.

    scat_e[m, q] = 1  iff  reflect(q - PC) == diff//2 + 2m   (even phase)
    scat_o[m, q] = 1  iff  reflect(q - PC) == diff//2 + 2m+1 (odd phase)
    Exact in bf16 (values 0/1); constant-folded under jit (no per-call iota).
    """
    lup = _ST * lin
    diff = ls - lup
    assert diff >= 0, "negative F.pad (crop) path is unhandled"
    dl = diff // 2
    lp = ls + 2 * _PC
    m = jnp.arange(lin)[:, None]
    q = jnp.arange(lp)[None, :] - _PC
    q = jnp.where(q < 0, -q, q)
    q = jnp.where(q >= ls, 2 * (ls - 1) - q, q)
    scat_e = (q == _ST * m + dl).astype(jnp.bfloat16)
    scat_o = (q == _ST * m + 1 + dl).astype(jnp.bfloat16)
    return scat_e, scat_o


def unet_up_forward(kparams, x_skip, x):
    """Fused UNetUp forward: one gridless, all-VMEM pallas_call."""
    N, Cin, Lin = x.shape
    Ls = x_skip.shape[2]
    Cout = kparams["w1"].shape[0]
    Lpp = Lin + 2 * _XPAD
    bf16 = jnp.bfloat16

    # Layout plumbing only (no compute): per-sample zero pad for the polyphase
    # tap windows, lane-dense (Cin, N*Lpp) slab + tap-overrun tail, bf16 operands.
    xp = jnp.pad(jnp.transpose(x, (1, 0, 2)), ((0, 0), (0, 0), (_XPAD, _XPAD)))
    x_slab = jnp.pad(xp.reshape(Cin, N * Lpp), ((0, 0), (0, _TAPS))).astype(bf16)
    skip_b = x_skip.astype(bf16)
    scat_e, scat_o = _phase_scatter_mats(Lin, Ls)

    vmem = pl.BlockSpec(memory_space=pltpu.MemorySpace.VMEM)
    # TODO(synk): at realistic UNet sizes add an L-tiled grid (parallel axis for
    # v7x's 2 TCs, grid-accumulated BN sum/sumsq, vmem_limit_bytes sized per
    # generation); at these toy shapes a single program is overhead-optimal.
    out_slab = pl.pallas_call(
        functools.partial(_unet_up_fused_kernel, n=N, lin=Lin),
        out_shape=jax.ShapeDtypeStruct((Cout, N * Ls), jnp.float32),
        in_specs=[vmem] * 13,
        out_specs=vmem,
    )(x_slab, skip_b, scat_e, scat_o,
      kparams["w_up_e"], kparams["w_up_o"], kparams["b_up"],
      kparams["w1"], kparams["g1"], kparams["be1"],
      kparams["w2"], kparams["g2"], kparams["be2"])
    # Lane-dense (Cout, N*Ls) slab -> NCL; transpose outside the kernel.
    return jnp.transpose(out_slab.reshape(Cout, N, Ls), (1, 0, 2))


# ----------------------------------------------------------------------------
# Pure-JAX reference (PyTorch semantics) for in-script verification
# ----------------------------------------------------------------------------
def _reference_forward(params, x_skip, x):
    dn = ("NCH", "OIH", "NCH")
    # ConvTranspose1d == input-dilated correlation with flipped/transposed kernel.
    w_t = jnp.flip(jnp.transpose(params["up_w"], (1, 0, 2)), axis=2)
    y = lax.conv_general_dilated(x, w_t, window_strides=(1,),
                                 padding=[(_KT - 1 - _PT, _KT - 1 - _PT)],
                                 lhs_dilation=(_ST,), dimension_numbers=dn)
    y = y + params["up_b"][None, :, None]
    diff = x_skip.shape[2] - y.shape[2]
    y = jnp.pad(y, ((0, 0), (0, 0), (diff // 2, diff - diff // 2)))
    h = jnp.concatenate([x_skip, y], axis=1)

    def conv_bn_relu(h, w, b, g, be):
        hp = jnp.pad(h, ((0, 0), (0, 0), (_PC, _PC)), mode="reflect")
        z = lax.conv_general_dilated(hp, w, window_strides=(1,),
                                     padding=[(0, 0)], dimension_numbers=dn)
        z = z + b[None, :, None]
        mean = jnp.mean(z, axis=(0, 2), keepdims=True)
        var = jnp.mean((z - mean) ** 2, axis=(0, 2), keepdims=True)
        z = (z - mean) * lax.rsqrt(var + _EPS)
        return jnp.maximum(g[None, :, None] * z + be[None, :, None], 0.0)

    h = conv_bn_relu(h, params["w1"], params["b1"], params["g1"], params["be1"])
    return conv_bn_relu(h, params["w2"], params["b2"], params["g2"], params["be2"])


# ----------------------------------------------------------------------------
# Deterministic parameter init (shapes from UNetUp.__init__)
# ----------------------------------------------------------------------------
def init_params(key, in_ch, in_ch_skip, out_ch, kt=_KT, kc=_KC):
    keys = jax.random.split(key, 8)
    cin_cat = in_ch + in_ch_skip
    return {
        # ConvTranspose1d(in_ch, in_ch, k=8): weight (Cin, Cout, K)
        "up_w": 0.1 * jax.random.normal(keys[0], (in_ch, in_ch, kt), jnp.float32),
        "up_b": 0.1 * jax.random.normal(keys[1], (in_ch,), jnp.float32),
        # Conv1d(cin_cat, out_ch, k=9)   (bias kept for the reference; it cancels
        # inside train-mode BN, so the kernel never consumes it)
        "w1": 0.1 * jax.random.normal(keys[2], (out_ch, cin_cat, kc), jnp.float32),
        "b1": 0.1 * jax.random.normal(keys[3], (out_ch,), jnp.float32),
        "g1": jnp.ones((out_ch,), jnp.float32),
        "be1": jnp.zeros((out_ch,), jnp.float32),
        # Conv1d(out_ch, out_ch, k=9)
        "w2": 0.1 * jax.random.normal(keys[4], (out_ch, out_ch, kc), jnp.float32),
        "b2": 0.1 * jax.random.normal(keys[5], (out_ch,), jnp.float32),
        "g2": jnp.ones((out_ch,), jnp.float32),
        "be2": jnp.zeros((out_ch,), jnp.float32),
    }
    # TODO(synk): BatchNorm1d running_mean/running_var buffer updates (a
    # training-time side effect of the PyTorch module) are not produced.


if __name__ == "__main__":
    # small shapes: N=2, in_channels=4, in_channels_skip=4, out_channels=8
    # X: (2, 4, 8) -> upsampled to length 16;  X_skip: (2, 4, 16)
    N, IN_CH, SKIP_CH, OUT_CH = 2, 4, 4, 8
    L_IN, L_SKIP = 8, 16

    key = jax.random.PRNGKey(0)
    k_params, k_x, k_skip = jax.random.split(key, 3)
    params = init_params(k_params, IN_CH, SKIP_CH, OUT_CH)
    kparams = prepare_params(params)
    x = jax.random.normal(k_x, (N, IN_CH, L_IN), jnp.float32)
    x_skip = jax.random.normal(k_skip, (N, SKIP_CH, L_SKIP), jnp.float32)

    fwd = jax.jit(functools.partial(unet_up_forward, kparams))
    out = fwd(x_skip, x)
    jax.block_until_ready(out)

    assert out.shape == (N, OUT_CH, L_SKIP), out.shape
    assert bool(jnp.all(jnp.isfinite(out)))

    # Verify against the pure-JAX reference (loose tolerance for bf16 matmuls).
    ref = _reference_forward(params, x_skip, x)
    max_err = float(jnp.max(jnp.abs(out - ref)))
    assert bool(jnp.allclose(out, ref, rtol=5e-2, atol=5e-2)), max_err

    print("KERNEL_OK")
</pallas_src>

<mosaic_0001>
module attributes {stable_mosaic.version = 11 : i64} {
  func.func @_unet_up_fused_kernel(%arg0: memref<4x28xbf16, #tpu.memory_space<vmem>>, %arg1: memref<2x4x16xbf16, #tpu.memory_space<vmem>>, %arg2: memref<8x24xbf16, #tpu.memory_space<vmem>>, %arg3: memref<8x24xbf16, #tpu.memory_space<vmem>>, %arg4: memref<4x16xbf16, #tpu.memory_space<vmem>>, %arg5: memref<4x16xbf16, #tpu.memory_space<vmem>>, %arg6: memref<4x1xf32, #tpu.memory_space<vmem>>, %arg7: memref<8x72xbf16, #tpu.memory_space<vmem>>, %arg8: memref<8x1xf32, #tpu.memory_space<vmem>>, %arg9: memref<8x1xf32, #tpu.memory_space<vmem>>, %arg10: memref<8x72xbf16, #tpu.memory_space<vmem>>, %arg11: memref<8x1xf32, #tpu.memory_space<vmem>>, %arg12: memref<8x1xf32, #tpu.memory_space<vmem>>, %arg13: memref<8x32xf32, #tpu.memory_space<vmem>>) attributes {dimension_semantics = [], scalar_prefetch = 0 : i64, scratch_operands = 0 : i64, tpu.core_type = #tpu.core_type<tc>} {
    %c0 = arith.constant 0 : index
    %c0_0 = arith.constant 0 : index
    %0 = vector.load %arg0[%c0, %c0_0] : memref<4x28xbf16, #tpu.memory_space<vmem>>, vector<4x28xbf16>
    %1 = vector.extract_strided_slice %0 {offsets = [0, 0], sizes = [4, 24], strides = [1, 1]} : vector<4x28xbf16> to vector<4x24xbf16>
    %2 = vector.extract_strided_slice %0 {offsets = [0, 1], sizes = [4, 24], strides = [1, 1]} : vector<4x28xbf16> to vector<4x24xbf16>
    %3 = vector.extract_strided_slice %0 {offsets = [0, 2], sizes = [4, 24], strides = [1, 1]} : vector<4x28xbf16> to vector<4x24xbf16>
    %4 = vector.extract_strided_slice %0 {offsets = [0, 3], sizes = [4, 24], strides = [1, 1]} : vector<4x28xbf16> to vector<4x24xbf16>
    %5 = tpu.concatenate %1, %2, %3, %4 in 0 : vector<4x24xbf16>, vector<4x24xbf16>, vector<4x24xbf16>, vector<4x24xbf16> -> vector<16x24xbf16>
    %6 = vector.extract_strided_slice %0 {offsets = [0, 1], sizes = [4, 24], strides = [1, 1]} : vector<4x28xbf16> to vector<4x24xbf16>
    %7 = vector.extract_strided_slice %0 {offsets = [0, 2], sizes = [4, 24], strides = [1, 1]} : vector<4x28xbf16> to vector<4x24xbf16>
    %8 = vector.extract_strided_slice %0 {offsets = [0, 3], sizes = [4, 24], strides = [1, 1]} : vector<4x28xbf16> to vector<4x24xbf16>
    %9 = vector.extract_strided_slice %0 {offsets = [0, 4], sizes = [4, 24], strides = [1, 1]} : vector<4x28xbf16> to vector<4x24xbf16>
    %10 = tpu.concatenate %6, %7, %8, %9 in 0 : vector<4x24xbf16>, vector<4x24xbf16>, vector<4x24xbf16>, vector<4x24xbf16> -> vector<16x24xbf16>
    %c0_1 = arith.constant 0 : index
    %c0_2 = arith.constant 0 : index
    %11 = vector.load %arg4[%c0_1, %c0_2] : memref<4x16xbf16, #tpu.memory_space<vmem>>, vector<4x16xbf16>
    %cst = arith.constant dense<0.000000e+00> : vector<4x24xf32>
    %12 = tpu.matmul %11, %5, %cst {dimension_numbers = #tpu.dot_dimension_numbers<[1], [0], [0], [1], [0, 0, 1, 1], [], []>} : vector<4x16xbf16>, vector<16x24xbf16>, vector<4x24xf32> -> vector<4x24xf32>
    %c0_3 = arith.constant 0 : index
    %c0_4 = arith.constant 0 : index
    %13 = vector.load %arg5[%c0_3, %c0_4] : memref<4x16xbf16, #tpu.memory_space<vmem>>, vector<4x16xbf16>
    %cst_5 = arith.constant dense<0.000000e+00> : vector<4x24xf32>
    %14 = tpu.matmul %13, %10, %cst_5 {dimension_numbers = #tpu.dot_dimension_numbers<[1], [0], [0], [1], [0, 0, 1, 1], [], []>} : vector<4x16xbf16>, vector<16x24xbf16>, vector<4x24xf32> -> vector<4x24xf32>
    %c0_6 = arith.constant 0 : index
    %c0_7 = arith.constant 0 : index
    %15 = vector.load %arg6[%c0_6, %c0_7] : memref<4x1xf32, #tpu.memory_space<vmem>>, vector<4x1xf32>
    %16 = vector.broadcast %15 : vector<4x1xf32> to vector<4x24xf32>
    %17 = arith.addf %12, %16 : vector<4x24xf32>
    %18 = arith.truncf %17 : vector<4x24xf32> to vector<4x24xbf16>
    %c0_8 = arith.constant 0 : index
    %c0_9 = arith.constant 0 : index
    %19 = vector.load %arg6[%c0_8, %c0_9] : memref<4x1xf32, #tpu.memory_space<vmem>>, vector<4x1xf32>
    %20 = vector.broadcast %19 : vector<4x1xf32> to vector<4x24xf32>
    %21 = arith.addf %14, %20 : vector<4x24xf32>
    %22 = arith.truncf %21 : vector<4x24xf32> to vector<4x24xbf16>
    %c0_10 = arith.constant 0 : index
    %c0_11 = arith.constant 0 : index
    %23 = vector.load %arg2[%c0_10, %c0_11] : memref<8x24xbf16, #tpu.memory_space<vmem>>, vector<8x24xbf16>
    %c0_12 = arith.constant 0 : index
    %c0_13 = arith.constant 0 : index
    %24 = vector.load %arg3[%c0_12, %c0_13] : memref<8x24xbf16, #tpu.memory_space<vmem>>, vector<8x24xbf16>
    %cst_14 = arith.constant 0.000000e+00 : bf16
    %25 = vector.broadcast %cst_14 : bf16 to vector<8x8xbf16>
    %c0_15 = arith.constant 0 : index
    %c0_16 = arith.constant 0 : index
    %c0_17 = arith.constant 0 : index
    %26 = vector.load %arg1[%c0_15, %c0_16, %c0_17] : memref<2x4x16xbf16, #tpu.memory_space<vmem>>, vector<1x4x16xbf16>
    %27 = vector.shape_cast %26 : vector<1x4x16xbf16> to vector<4x16xbf16>
    %28 = vector.extract_strided_slice %27 {offsets = [0, 4], sizes = [4, 1], strides = [1, 1]} : vector<4x16xbf16> to vector<4x1xbf16>
    %29 = vector.extract_strided_slice %27 {offsets = [0, 3], sizes = [4, 1], strides = [1, 1]} : vector<4x16xbf16> to vector<4x1xbf16>
    %30 = vector.extract_strided_slice %27 {offsets = [0, 2], sizes = [4, 1], strides = [1, 1]} : vector<4x16xbf16> to vector<4x1xbf16>
    %31 = vector.extract_strided_slice %27 {offsets = [0, 1], sizes = [4, 1], strides = [1, 1]} : vector<4x16xbf16> to vector<4x1xbf16>
    %32 = vector.extract_strided_slice %27 {offsets = [0, 14], sizes = [4, 1], strides = [1, 1]} : vector<4x16xbf16> to vector<4x1xbf16>
    %33 = vector.extract_strided_slice %27 {offsets = [0, 13], sizes = [4, 1], strides = [1, 1]} : vector<4x16xbf16> to vector<4x1xbf16>
    %34 = vector.extract_strided_slice %27 {offsets = [0, 12], sizes = [4, 1], strides = [1, 1]} : vector<4x16xbf16> to vector<4x1xbf16>
    %35 = vector.extract_strided_slice %27 {offsets = [0, 11], sizes = [4, 1], strides = [1, 1]} : vector<4x16xbf16> to vector<4x1xbf16>
    %36 = tpu.concatenate %28, %29, %30, %31, %27, %32, %33, %34, %35 in 1 : vector<4x1xbf16>, vector<4x1xbf16>, vector<4x1xbf16>, vector<4x1xbf16>, vector<4x16xbf16>, vector<4x1xbf16>, vector<4x1xbf16>, vector<4x1xbf16>, vector<4x1xbf16> -> vector<4x24xbf16>
    %37 = vector.extract_strided_slice %18 {offsets = [0, 0], sizes = [4, 8], strides = [1, 1]} : vector<4x24xbf16> to vector<4x8xbf16>
    %cst_18 = arith.constant dense<0.000000e+00> : vector<4x24xf32>
    %38 = tpu.matmul %37, %23, %cst_18 {dimension_numbers = #tpu.dot_dimension_numbers<[1], [0], [0], [1], [0, 0, 1, 1], [], []>} : vector<4x8xbf16>, vector<8x24xbf16>, vector<4x24xf32> -> vector<4x24xf32>
    %39 = vector.extract_strided_slice %22 {offsets = [0, 0], sizes = [4, 8], strides = [1, 1]} : vector<4x24xbf16> to vector<4x8xbf16>
    %cst_19 = arith.constant dense<0.000000e+00> : vector<4x24xf32>
    %40 = tpu.matmul %39, %24, %cst_19 {dimension_numbers = #tpu.dot_dimension_numbers<[1], [0], [0], [1], [0, 0, 1, 1], [], []>} : vector<4x8xbf16>, vector<8x24xbf16>, vector<4x24xf32> -> vector<4x24xf32>
    %41 = arith.addf %38, %40 : vector<4x24xf32>
    %42 = arith.truncf %41 : vector<4x24xf32> to vector<4x24xbf16>
    %43 = tpu.concatenate %36, %42 in 0 : vector<4x24xbf16>, vector<4x24xbf16> -> vector<8x24xbf16>
    %c1 = arith.constant 1 : index
    %c0_20 = arith.constant 0 : index
    %c0_21 = arith.constant 0 : index
    %44 = vector.load %arg1[%c1, %c0_20, %c0_21] : memref<2x4x16xbf16, #tpu.memory_space<vmem>>, vector<1x4x16xbf16>
    %45 = vector.shape_cast %44 : vector<1x4x16xbf16> to vector<4x16xbf16>
    %46 = vector.extract_strided_slice %45 {offsets = [0, 4], sizes = [4, 1], strides = [1, 1]} : vector<4x16xbf16> to vector<4x1xbf16>
    %47 = vector.extract_strided_slice %45 {offsets = [0, 3], sizes = [4, 1], strides = [1, 1]} : vector<4x16xbf16> to vector<4x1xbf16>
    %48 = vector.extract_strided_slice %45 {offsets = [0, 2], sizes = [4, 1], strides = [1, 1]} : vector<4x16xbf16> to vector<4x1xbf16>
    %49 = vector.extract_strided_slice %45 {offsets = [0, 1], sizes = [4, 1], strides = [1, 1]} : vector<4x16xbf16> to vector<4x1xbf16>
    %50 = vector.extract_strided_slice %45 {offsets = [0, 14], sizes = [4, 1], strides = [1, 1]} : vector<4x16xbf16> to vector<4x1xbf16>
    %51 = vector.extract_strided_slice %45 {offsets = [0, 13], sizes = [4, 1], strides = [1, 1]} : vector<4x16xbf16> to vector<4x1xbf16>
    %52 = vector.extract_strided_slice %45 {offsets = [0, 12], sizes = [4, 1], strides = [1, 1]} : vector<4x16xbf16> to vector<4x1xbf16>
    %53 = vector.extract_strided_slice %45 {offsets = [0, 11], sizes = [4, 1], strides = [1, 1]} : vector<4x16xbf16> to vector<4x1xbf16>
    %54 = tpu.concatenate %46, %47, %48, %49, %45, %50, %51, %52, %53 in 1 : vector<4x1xbf16>, vector<4x1xbf16>, vector<4x1xbf16>, vector<4x1xbf16>, vector<4x16xbf16>, vector<4x1xbf16>, vector<4x1xbf16>, vector<4x1xbf16>, vector<4x1xbf16> -> vector<4x24xbf16>
    %55 = vector.extract_strided_slice %18 {offsets = [0, 12], sizes = [4, 8], strides = [1, 1]} : vector<4x24xbf16> to vector<4x8xbf16>
    %cst_22 = arith.constant dense<0.000000e+00> : vector<4x24xf32>
    %56 = tpu.matmul %55, %23, %cst_22 {dimension_numbers = #tpu.dot_dimension_numbers<[1], [0], [0], [1], [0, 0, 1, 1], [], []>} : vector<4x8xbf16>, vector<8x24xbf16>, vector<4x24xf32> -> vector<4x24xf32>
    %57 = vector.extract_strided_slice %22 {offsets = [0, 12], sizes = [4, 8], strides = [1, 1]} : vector<4x24xbf16> to vector<4x8xbf16>
    %cst_23 = arith.constant dense<0.000000e+00> : vector<4x24xf32>
    %58 = tpu.matmul %57, %24, %cst_23 {dimension_numbers = #tpu.dot_dimension_numbers<[1], [0], [0], [1], [0, 0, 1, 1], [], []>} : vector<4x8xbf16>, vector<8x24xbf16>, vector<4x24xf32> -> vector<4x24xf32>
    %59 = arith.addf %56, %58 : vector<4x24xf32>
    %60 = arith.truncf %59 : vector<4x24xf32> to vector<4x24xbf16>
    %61 = tpu.concatenate %54, %60 in 0 : vector<4x24xbf16>, vector<4x24xbf16> -> vector<8x24xbf16>
    %62 = tpu.concatenate %43, %61, %25 in 1 : vector<8x24xbf16>, vector<8x24xbf16>, vector<8x8xbf16> -> vector<8x56xbf16>
    %c0_24 = arith.constant 0 : index
    %c0_25 = arith.constant 0 : index
    %63 = vector.load %arg7[%c0_24, %c0_25] : memref<8x72xbf16, #tpu.memory_space<vmem>>, vector<8x72xbf16>
    %c0_26 = arith.constant 0 : index
    %c0_27 = arith.constant 0 : index
    %64 = vector.load %arg8[%c0_26, %c0_27] : memref<8x1xf32, #tpu.memory_space<vmem>>, vector<8x1xf32>
    %c0_28 = arith.constant 0 : index
    %c0_29 = arith.constant 0 : index
    %65 = vector.load %arg9[%c0_28, %c0_29] : memref<8x1xf32, #tpu.memory_space<vmem>>, vector<8x1xf32>
    %66 = vector.extract_strided_slice %62 {offsets = [0, 0], sizes = [8, 48], strides = [1, 1]} : vector<8x56xbf16> to vector<8x48xbf16>
    %67 = vector.extract_strided_slice %62 {offsets = [0, 1], sizes = [8, 48], strides = [1, 1]} : vector<8x56xbf16> to vector<8x48xbf16>
    %68 = vector.extract_strided_slice %62 {offsets = [0, 2], sizes = [8, 48], strides = [1, 1]} : vector<8x56xbf16> to vector<8x48xbf16>
    %69 = vector.extract_strided_slice %62 {offsets = [0, 3], sizes = [8, 48], strides = [1, 1]} : vector<8x56xbf16> to vector<8x48xbf16>
    %70 = vector.extract_strided_slice %62 {offsets = [0, 4], sizes = [8, 48], strides = [1, 1]} : vector<8x56xbf16> to vector<8x48xbf16>
    %71 = vector.extract_strided_slice %62 {offsets = [0, 5], sizes = [8, 48], strides = [1, 1]} : vector<8x56xbf16> to vector<8x48xbf16>
    %72 = vector.extract_strided_slice %62 {offsets = [0, 6], sizes = [8, 48], strides = [1, 1]} : vector<8x56xbf16> to vector<8x48xbf16>
    %73 = vector.extract_strided_slice %62 {offsets = [0, 7], sizes = [8, 48], strides = [1, 1]} : vector<8x56xbf16> to vector<8x48xbf16>
    %74 = vector.extract_strided_slice %62 {offsets = [0, 8], sizes = [8, 48], strides = [1, 1]} : vector<8x56xbf16> to vector<8x48xbf16>
    %75 = tpu.concatenate %66, %67, %68, %69, %70, %71, %72, %73, %74 in 0 : vector<8x48xbf16>, vector<8x48xbf16>, vector<8x48xbf16>, vector<8x48xbf16>, vector<8x48xbf16>, vector<8x48xbf16>, vector<8x48xbf16>, vector<8x48xbf16>, vector<8x48xbf16> -> vector<72x48xbf16>
    %cst_30 = arith.constant dense<0.000000e+00> : vector<8x48xf32>
    %76 = tpu.matmul %63, %75, %cst_30 {dimension_numbers = #tpu.dot_dimension_numbers<[1], [0], [0], [1], [0, 0, 1, 1], [], []>} : vector<8x72xbf16>, vector<72x48xbf16>, vector<8x48xf32> -> vector<8x48xf32>
    %77 = vector.extract_strided_slice %76 {offsets = [0, 0], sizes = [8, 16], strides = [1, 1]} : vector<8x48xf32> to vector<8x16xf32>
    %78 = vector.extract_strided_slice %76 {offsets = [0, 24], sizes = [8, 16], strides = [1, 1]} : vector<8x48xf32> to vector<8x16xf32>
    %79 = tpu.concatenate %77, %78 in 1 : vector<8x16xf32>, vector<8x16xf32> -> vector<8x32xf32>
    %cst_31 = arith.constant dense<0.000000e+00> : vector<8xf32>
    %80 = vector.multi_reduction <add>, %79, %cst_31 [1] : vector<8x32xf32> to vector<8xf32>
    %81 = vector.shape_cast %80 : vector<8xf32> to vector<8x1xf32>
    %82 = arith.mulf %79, %79 : vector<8x32xf32>
    %cst_32 = arith.constant dense<0.000000e+00> : vector<8xf32>
    %83 = vector.multi_reduction <add>, %82, %cst_32 [1] : vector<8x32xf32> to vector<8xf32>
    %84 = vector.shape_cast %83 : vector<8xf32> to vector<8x1xf32>
    %cst_33 = arith.constant 3.200000e+01 : f32
    %85 = vector.broadcast %cst_33 : f32 to vector<8x1xf32>
    %86 = arith.divf %81, %85 : vector<8x1xf32>
    %cst_34 = arith.constant 3.200000e+01 : f32
    %87 = vector.broadcast %cst_34 : f32 to vector<8x1xf32>
    %88 = arith.divf %84, %87 : vector<8x1xf32>
    %89 = arith.mulf %86, %86 : vector<8x1xf32>
    %90 = arith.subf %88, %89 : vector<8x1xf32>
    %cst_35 = arith.constant 9.99999974E-6 : f32
    %91 = vector.broadcast %cst_35 : f32 to vector<8x1xf32>
    %92 = arith.addf %90, %91 : vector<8x1xf32>
    %93 = math.rsqrt %92 : vector<8x1xf32>
    %94 = arith.mulf %64, %93 : vector<8x1xf32>
    %95 = vector.broadcast %94 : vector<8x1xf32> to vector<8x32xf32>
    %96 = arith.mulf %79, %95 : vector<8x32xf32>
    %97 = arith.mulf %86, %94 : vector<8x1xf32>
    %98 = arith.subf %65, %97 : vector<8x1xf32>
    %99 = vector.broadcast %98 : vector<8x1xf32> to vector<8x32xf32>
    %100 = arith.addf %96, %99 : vector<8x32xf32>
    %cst_36 = arith.constant 0.000000e+00 : f32
    %101 = vector.broadcast %cst_36 : f32 to vector<8x32xf32>
    %102 = arith.maximumf %100, %101 : vector<8x32xf32>
    %103 = arith.truncf %102 : vector<8x32xf32> to vector<8x32xbf16>
    %cst_37 = arith.constant 0.000000e+00 : bf16
    %104 = vector.broadcast %cst_37 : bf16 to vector<8x8xbf16>
    %105 = vector.extract_strided_slice %103 {offsets = [0, 4], sizes = [8, 1], strides = [1, 1]} : vector<8x32xbf16> to vector<8x1xbf16>
    %106 = vector.extract_strided_slice %103 {offsets = [0, 3], sizes = [8, 1], strides = [1, 1]} : vector<8x32xbf16> to vector<8x1xbf16>
    %107 = vector.extract_strided_slice %103 {offsets = [0, 2], sizes = [8, 1], strides = [1, 1]} : vector<8x32xbf16> to vector<8x1xbf16>
    %108 = vector.extract_strided_slice %103 {offsets = [0, 1], sizes = [8, 1], strides = [1, 1]} : vector<8x32xbf16> to vector<8x1xbf16>
    %109 = vector.extract_strided_slice %103 {offsets = [0, 14], sizes = [8, 1], strides = [1, 1]} : vector<8x32xbf16> to vector<8x1xbf16>
    %110 = vector.extract_strided_slice %103 {offsets = [0, 13], sizes = [8, 1], strides = [1, 1]} : vector<8x32xbf16> to vector<8x1xbf16>
    %111 = vector.extract_strided_slice %103 {offsets = [0, 12], sizes = [8, 1], strides = [1, 1]} : vector<8x32xbf16> to vector<8x1xbf16>
    %112 = vector.extract_strided_slice %103 {offsets = [0, 11], sizes = [8, 1], strides = [1, 1]} : vector<8x32xbf16> to vector<8x1xbf16>
    %113 = vector.extract_strided_slice %103 {offsets = [0, 0], sizes = [8, 16], strides = [1, 1]} : vector<8x32xbf16> to vector<8x16xbf16>
    %114 = tpu.concatenate %105, %106, %107, %108, %113, %109, %110, %111, %112 in 1 : vector<8x1xbf16>, vector<8x1xbf16>, vector<8x1xbf16>, vector<8x1xbf16>, vector<8x16xbf16>, vector<8x1xbf16>, vector<8x1xbf16>, vector<8x1xbf16>, vector<8x1xbf16> -> vector<8x24xbf16>
    %115 = vector.extract_strided_slice %103 {offsets = [0, 20], sizes = [8, 1], strides = [1, 1]} : vector<8x32xbf16> to vector<8x1xbf16>
    %116 = vector.extract_strided_slice %103 {offsets = [0, 19], sizes = [8, 1], strides = [1, 1]} : vector<8x32xbf16> to vector<8x1xbf16>
    %117 = vector.extract_strided_slice %103 {offsets = [0, 18], sizes = [8, 1], strides = [1, 1]} : vector<8x32xbf16> to vector<8x1xbf16>
    %118 = vector.extract_strided_slice %103 {offsets = [0, 17], sizes = [8, 1], strides = [1, 1]} : vector<8x32xbf16> to vector<8x1xbf16>
    %119 = vector.extract_strided_slice %103 {offsets = [0, 30], sizes = [8, 1], strides = [1, 1]} : vector<8x32xbf16> to vector<8x1xbf16>
    %120 = vector.extract_strided_slice %103 {offsets = [0, 29], sizes = [8, 1], strides = [1, 1]} : vector<8x32xbf16> to vector<8x1xbf16>
    %121 = vector.extract_strided_slice %103 {offsets = [0, 28], sizes = [8, 1], strides = [1, 1]} : vector<8x32xbf16> to vector<8x1xbf16>
    %122 = vector.extract_strided_slice %103 {offsets = [0, 27], sizes = [8, 1], strides = [1, 1]} : vector<8x32xbf16> to vector<8x1xbf16>
    %123 = vector.extract_strided_slice %103 {offsets = [0, 16], sizes = [8, 16], strides = [1, 1]} : vector<8x32xbf16> to vector<8x16xbf16>
    %124 = tpu.concatenate %115, %116, %117, %118, %123, %119, %120, %121, %122 in 1 : vector<8x1xbf16>, vector<8x1xbf16>, vector<8x1xbf16>, vector<8x1xbf16>, vector<8x16xbf16>, vector<8x1xbf16>, vector<8x1xbf16>, vector<8x1xbf16>, vector<8x1xbf16> -> vector<8x24xbf16>
    %125 = tpu.concatenate %114, %124, %104 in 1 : vector<8x24xbf16>, vector<8x24xbf16>, vector<8x8xbf16> -> vector<8x56xbf16>
    %c0_38 = arith.constant 0 : index
    %c0_39 = arith.constant 0 : index
    %126 = vector.load %arg10[%c0_38, %c0_39] : memref<8x72xbf16, #tpu.memory_space<vmem>>, vector<8x72xbf16>
    %c0_40 = arith.constant 0 : index
    %c0_41 = arith.constant 0 : index
    %127 = vector.load %arg11[%c0_40, %c0_41] : memref<8x1xf32, #tpu.memory_space<vmem>>, vector<8x1xf32>
    %c0_42 = arith.constant 0 : index
    %c0_43 = arith.constant 0 : index
    %128 = vector.load %arg12[%c0_42, %c0_43] : memref<8x1xf32, #tpu.memory_space<vmem>>, vector<8x1xf32>
    %129 = vector.extract_strided_slice %125 {offsets = [0, 0], sizes = [8, 48], strides = [1, 1]} : vector<8x56xbf16> to vector<8x48xbf16>
    %130 = vector.extract_strided_slice %125 {offsets = [0, 1], sizes = [8, 48], strides = [1, 1]} : vector<8x56xbf16> to vector<8x48xbf16>
    %131 = vector.extract_strided_slice %125 {offsets = [0, 2], sizes = [8, 48], strides = [1, 1]} : vector<8x56xbf16> to vector<8x48xbf16>
    %132 = vector.extract_strided_slice %125 {offsets = [0, 3], sizes = [8, 48], strides = [1, 1]} : vector<8x56xbf16> to vector<8x48xbf16>
    %133 = vector.extract_strided_slice %125 {offsets = [0, 4], sizes = [8, 48], strides = [1, 1]} : vector<8x56xbf16> to vector<8x48xbf16>
    %134 = vector.extract_strided_slice %125 {offsets = [0, 5], sizes = [8, 48], strides = [1, 1]} : vector<8x56xbf16> to vector<8x48xbf16>
    %135 = vector.extract_strided_slice %125 {offsets = [0, 6], sizes = [8, 48], strides = [1, 1]} : vector<8x56xbf16> to vector<8x48xbf16>
    %136 = vector.extract_strided_slice %125 {offsets = [0, 7], sizes = [8, 48], strides = [1, 1]} : vector<8x56xbf16> to vector<8x48xbf16>
    %137 = vector.extract_strided_slice %125 {offsets = [0, 8], sizes = [8, 48], strides = [1, 1]} : vector<8x56xbf16> to vector<8x48xbf16>
    %138 = tpu.concatenate %129, %130, %131, %132, %133, %134, %135, %136, %137 in 0 : vector<8x48xbf16>, vector<8x48xbf16>, vector<8x48xbf16>, vector<8x48xbf16>, vector<8x48xbf16>, vector<8x48xbf16>, vector<8x48xbf16>, vector<8x48xbf16>, vector<8x48xbf16> -> vector<72x48xbf16>
    %cst_44 = arith.constant dense<0.000000e+00> : vector<8x48xf32>
    %139 = tpu.matmul %126, %138, %cst_44 {dimension_numbers = #tpu.dot_dimension_numbers<[1], [0], [0], [1], [0, 0, 1, 1], [], []>} : vector<8x72xbf16>, vector<72x48xbf16>, vector<8x48xf32> -> vector<8x48xf32>
    %140 = vector.extract_strided_slice %139 {offsets = [0, 0], sizes = [8, 16], strides = [1, 1]} : vector<8x48xf32> to vector<8x16xf32>
    %141 = vector.extract_strided_slice %139 {offsets = [0, 24], sizes = [8, 16], strides = [1, 1]} : vector<8x48xf32> to vector<8x16xf32>
    %142 = tpu.concatenate %140, %141 in 1 : vector<8x16xf32>, vector<8x16xf32> -> vector<8x32xf32>
    %cst_45 = arith.constant dense<0.000000e+00> : vector<8xf32>
    %143 = vector.multi_reduction <add>, %142, %cst_45 [1] : vector<8x32xf32> to vector<8xf32>
    %144 = vector.shape_cast %143 : vector<8xf32> to vector<8x1xf32>
    %145 = arith.mulf %142, %142 : vector<8x32xf32>
    %cst_46 = arith.constant dense<0.000000e+00> : vector<8xf32>
    %146 = vector.multi_reduction <add>, %145, %cst_46 [1] : vector<8x32xf32> to vector<8xf32>
    %147 = vector.shape_cast %146 : vector<8xf32> to vector<8x1xf32>
    %cst_47 = arith.constant 3.200000e+01 : f32
    %148 = vector.broadcast %cst_47 : f32 to vector<8x1xf32>
    %149 = arith.divf %144, %148 : vector<8x1xf32>
    %cst_48 = arith.constant 3.200000e+01 : f32
    %150 = vector.broadcast %cst_48 : f32 to vector<8x1xf32>
    %151 = arith.divf %147, %150 : vector<8x1xf32>
    %152 = arith.mulf %149, %149 : vector<8x1xf32>
    %153 = arith.subf %151, %152 : vector<8x1xf32>
    %cst_49 = arith.constant 9.99999974E-6 : f32
    %154 = vector.broadcast %cst_49 : f32 to vector<8x1xf32>
    %155 = arith.addf %153, %154 : vector<8x1xf32>
    %156 = math.rsqrt %155 : vector<8x1xf32>
    %157 = arith.mulf %127, %156 : vector<8x1xf32>
    %158 = vector.broadcast %157 : vector<8x1xf32> to vector<8x32xf32>
    %159 = arith.mulf %142, %158 : vector<8x32xf32>
    %160 = arith.mulf %149, %157 : vector<8x1xf32>
    %161 = arith.subf %128, %160 : vector<8x1xf32>
    %162 = vector.broadcast %161 : vector<8x1xf32> to vector<8x32xf32>
    %163 = arith.addf %159, %162 : vector<8x32xf32>
    %cst_50 = arith.constant 0.000000e+00 : f32
    %164 = vector.broadcast %cst_50 : f32 to vector<8x32xf32>
    %165 = arith.maximumf %163, %164 : vector<8x32xf32>
    %c0_51 = arith.constant 0 : index
    %c0_52 = arith.constant 0 : index
    %166 = vector.load %arg13[%c0_51, %c0_52] : memref<8x32xf32, #tpu.memory_space<vmem>>, vector<8x32xf32>
    tpu.vector_store %arg13[%c0_51, %c0_52], %165 {strides = array<i32>} : memref<8x32xf32, #tpu.memory_space<vmem>>, vector<8x32xf32>,
    return
  }
}

</mosaic_0001>

<llo_original>
// kernel: unet_up_forward.1
$region0: #{unet_up_forward.1}
  #allocation0 [shape = 'u32[]', space=smem, size = 0x4, offset = 0x4, fixed_abs, tag = 'smem constant byte address 0x4 - core index']
  #allocation1 [shape = 'u32[72,128]{1,0:T(1,128)}', space=vmem, size = 0x9000, scoped, tag = 'internal scratch']
  %s0 = inlined_call_operand.vmem [shape: bf16[4,28], index: 0, kind: input, shape index: {}]
  %s1 = inlined_call_operand.vmem [shape: bf16[2,4,16], index: 1, kind: input, shape index: {}]
  %s2 = inlined_call_operand.vmem [shape: bf16[8,24], index: 2, kind: input, shape index: {}]
  %s3 = inlined_call_operand.vmem [shape: bf16[8,24], index: 3, kind: input, shape index: {}]
  %s4 = inlined_call_operand.vmem [shape: bf16[4,16], index: 4, kind: input, shape index: {}]
  %s5 = inlined_call_operand.vmem [shape: bf16[4,16], index: 5, kind: input, shape index: {}]
  %s6 = inlined_call_operand.vmem [shape: f32[4,1], index: 6, kind: input, shape index: {}]
  %s7 = inlined_call_operand.vmem [shape: bf16[8,72], index: 7, kind: input, shape index: {}]
  %s8 = inlined_call_operand.vmem [shape: f32[8,1], index: 8, kind: input, shape index: {}, may-alias: {8,11}]
  %s9 = inlined_call_operand.vmem [shape: f32[8,1], index: 9, kind: input, shape index: {}, may-alias: {9,12}]
  %s10 = inlined_call_operand.vmem [shape: bf16[8,72], index: 10, kind: input, shape index: {}]
  %s11 = inlined_call_operand.vmem [shape: f32[8,1], index: 11, kind: input, shape index: {}, may-alias: {8,11}]
  %s12 = inlined_call_operand.vmem [shape: f32[8,1], index: 12, kind: input, shape index: {}, may-alias: {9,12}]
  %s13 = inlined_call_operand.vmem [shape: f32[8,32], index: 13, kind: output, shape index: {}]
  %s14 = sld [smem:[#allocation0]]
  $region62: #{unet_up_forward.1} parent=0
    _
  %s16 = ssub.s32 1, %s14
  %s17 = scalar_select 0, %s16, %s14
  // Predicated region
  $region2: #{unet_up_forward.1} parent=0 // pred_check
    _
  $region3: #{unet_up_forward.1} parent=0 // pred_check_branch
    %19 = sbr.rel (0) target = $region5
  $region4: #{unet_up_forward.1} parent=0 // pred_region
    _
  $region5: #{unet_up_forward.1} parent=0 // pred_fallthru
    _
  // Predicated region
  $region6: #{unet_up_forward.1} parent=0 // pred_check
    _
  $region7: #{unet_up_forward.1} parent=0 // pred_check_branch
    %21 = sbr.rel (0) target = $region9
  $region8: #{unet_up_forward.1} parent=0 // pred_region
    _
  $region9: #{unet_up_forward.1} parent=0 // pred_fallthru
    _
  // Predicated region
  $region10: #{unet_up_forward.1} parent=0 // pred_check
    _
  $region11: #{unet_up_forward.1} parent=0 // pred_check_branch
    %23 = sbr.rel (0) target = $region13
  $region12: #{unet_up_forward.1} parent=0 // pred_region
    _
  $region13: #{unet_up_forward.1} parent=0 // pred_fallthru
    _
  // Predicated region
  $region14: #{unet_up_forward.1} parent=0 // pred_check
    _
  $region15: #{unet_up_forward.1} parent=0 // pred_check_branch
    %25 = sbr.rel (0) target = $region17
  $region16: #{unet_up_forward.1} parent=0 // pred_region
    _
  $region17: #{unet_up_forward.1} parent=0 // pred_fallthru
    _
  // Predicated region
  $region18: #{unet_up_forward.1} parent=0 // pred_check
    _
  $region19: #{unet_up_forward.1} parent=0 // pred_check_branch
    %27 = sbr.rel (0) target = $region21
  $region20: #{unet_up_forward.1} parent=0 // pred_region
    _
  $region21: #{unet_up_forward.1} parent=0 // pred_fallthru
    _
  // Predicated region
  $region22: #{unet_up_forward.1} parent=0 // pred_check
    _
  $region23: #{unet_up_forward.1} parent=0 // pred_check_branch
    %29 = sbr.rel (0) target = $region25
  $region24: #{unet_up_forward.1} parent=0 // pred_region
    _
  $region25: #{unet_up_forward.1} parent=0 // pred_fallthru
    _
  // Predicated region
  $region26: #{unet_up_forward.1} parent=0 // pred_check
    _
  $region27: #{unet_up_forward.1} parent=0 // pred_check_branch
    %31 = sbr.rel (0) target = $region29
  $region28: #{unet_up_forward.1} parent=0 // pred_region
    _
  $region29: #{unet_up_forward.1} parent=0 // pred_fallthru
    _
  // Predicated region
  $region30: #{unet_up_forward.1} parent=0 // pred_check
    _
  $region31: #{unet_up_forward.1} parent=0 // pred_check_branch
    %33 = sbr.rel (0) target = $region33
  $region32: #{unet_up_forward.1} parent=0 // pred_region
    _
  $region33: #{unet_up_forward.1} parent=0 // pred_fallthru
    _
  // Predicated region
  $region34: #{unet_up_forward.1} parent=0 // pred_check
    _
  $region35: #{unet_up_forward.1} parent=0 // pred_check_branch
    %35 = sbr.rel (0) target = $region37
  $region36: #{unet_up_forward.1} parent=0 // pred_region
    _
  $region37: #{unet_up_forward.1} parent=0 // pred_fallthru
    _
  // Predicated region
  $region38: #{unet_up_forward.1} parent=0 // pred_check
    _
  $region39: #{unet_up_forward.1} parent=0 // pred_check_branch
    %37 = sbr.rel (0) target = $region41
  $region40: #{unet_up_forward.1} parent=0 // pred_region
    _
  $region41: #{unet_up_forward.1} parent=0 // pred_fallthru
    _
  // Predicated region
  $region42: #{unet_up_forward.1} parent=0 // pred_check
    _
  $region43: #{unet_up_forward.1} parent=0 // pred_check_branch
    %39 = sbr.rel (0) target = $region45
  $region44: #{unet_up_forward.1} parent=0 // pred_region
    _
  $region45: #{unet_up_forward.1} parent=0 // pred_fallthru
    _
  // Predicated region
  $region46: #{unet_up_forward.1} parent=0 // pred_check
    _
  $region47: #{unet_up_forward.1} parent=0 // pred_check_branch
    %41 = sbr.rel (0) target = $region49
  $region48: #{unet_up_forward.1} parent=0 // pred_region
    _
  $region49: #{unet_up_forward.1} parent=0 // pred_fallthru
    _
  // Predicated region
  $region50: #{unet_up_forward.1} parent=0 // pred_check
    _
  $region51: #{unet_up_forward.1} parent=0 // pred_check_branch
    %43 = sbr.rel (0) target = $region53
  $region52: #{unet_up_forward.1} parent=0 // pred_region
    _
  $region53: #{unet_up_forward.1} parent=0 // pred_fallthru
    _
  %v45 = vld [vmem:[%s0] sm:$0x3]
  %s47 = scalar_lea.vmem [#allocation1], 1
  %48 = vst [vmem:[%s47] ss:$4 sm:$0xff] %v45
  %v49 = vld.sshfl [vmem:[#allocation1] sm:$0xff pattern:$0x73625140]
  %51 = vrot.lane.b32.xlu0 %v49, 127
  %v52 = vpop.permute.xlu0 %51
  %s53 = scalar_lea.vmem [#allocation1], 2
  %54 = vst [vmem:[%s53] ss:$4 sm:$0xff] %v45
  %v55 = vld.sshfl [vmem:[#allocation1] sm:$0xff pattern:$0x73625140]
  %57 = vrot.lane.b32.xlu0 %v55, 126
  %v58 = vpop.permute.xlu0 %57
  %s59 = scalar_lea.vmem [#allocation1], 3
  %60 = vst [vmem:[%s59] ss:$4 sm:$0xff] %v45
  %v61 = vld.sshfl [vmem:[#allocation1] sm:$0xff pattern:$0x73625140]
  %63 = vrot.lane.b32.xlu0 %v61, 125
  %v64 = vpop.permute.xlu0 %63
  %vm65 = vcmask 1041408
  %v67 = vsel %vm65, %v45, %v52
  %vm68 = vcmask 1043456
  %v70 = vsel %vm68, %v67, %v58
  %vm71 = vcmask 1045504
  %v73 = vsel %vm71, %v70, %v64
  %s75 = scalar_lea.vmem [#allocation1], 1
  %76 = vst [vmem:[%s75] ss:$4 sm:$0xff] %v45
  %v77 = vld.sshfl [vmem:[#allocation1] sm:$0xff pattern:$0x73625140]
  %79 = vrot.lane.b32.xlu0 %v77, 127
  %v80 = vpop.permute.xlu0 %79
  %s81 = scalar_lea.vmem [#allocation1], 2
  %82 = vst [vmem:[%s81] ss:$4 sm:$0xff] %v45
  %v83 = vld.sshfl [vmem:[#allocation1] sm:$0xff pattern:$0x73625140]
  %85 = vrot.lane.b32.xlu0 %v83, 126
  %v86 = vpop.permute.xlu0 %85
  %s87 = scalar_lea.vmem [#allocation1], 3
  %88 = vst [vmem:[%s87] ss:$4 sm:$0xff] %v45
  %v89 = vld.sshfl [vmem:[#allocation1] sm:$0xff pattern:$0x73625140]
  %91 = vrot.lane.b32.xlu0 %v89, 125
  %v92 = vpop.permute.xlu0 %91
  %v94 = vsel %vm65, %v45, %v80
  %v96 = vsel %vm68, %v94, %v86
  %v98 = vsel %vm71, %v96, %v92
  %v99 = vld [vmem:[%s4] sm:$0x3]
  %v100 = vld [vmem:[%s5] sm:$0x3]
  %v101 = vld [vmem:[%s6] sm:$0xf]
  %103 = vset.pattern.permute.xlu0 0
  %104 = vperm.xlu0 %103, %v101
  %v105 = vpop.permute.xlu0 %104
  %vm107 = vcmask 130048
  %v109 = vsel %vm107, %v99, 0
  %111 = vmatpush.bf16.msra.mxu0 0
  %112 = vmatpush.bf16.msra.mxu0 0
  %113 = vmatpush.bf16.msra.mxu0 0
  %114 = vmatpush.bf16.msra.mxu0 0
  %115 = vmatpush.bf16.msra.mxu0 0
  %116 = vmatpush.bf16.msra.mxu0 0
  %117 = vmatpush.bf16.msra.mxu0 0
  %118 = vmatpush.bf16.msra.mxu0 %v73
  %119 = vmatmul.bf16.gmra.mxu0 %v109
  %v120 = vpop.f32.mrf.mxu0
  %v121 = vadd.f32 %v105, %v120
  %v122 = vpop.f32.mrf.mxu0
  %123 = vdwg.mxu0
  %v124 = vpack.c.bf16 %v121, %v121
  %126 = vrot.lane.b32.xlu0 %v98, 127
  %v127 = vpop.permute.xlu0 %126
  %v130 = vsel %vm107, %v100, 0
  %132 = vmatpush.bf16.msra.mxu0 0
  %133 = vmatpush.bf16.msra.mxu0 0
  %134 = vmatpush.bf16.msra.mxu0 0
  %135 = vmatpush.bf16.msra.mxu0 0
  %136 = vmatpush.bf16.msra.mxu0 0
  %137 = vmatpush.bf16.msra.mxu0 0
  %138 = vmatpush.bf16.msra.mxu0 0
  %139 = vmatpush.bf16.msra.mxu0 %v127
  %140 = vmatmul.bf16.gmra.mxu0 %v130
  %v141 = vpop.f32.mrf.mxu0
  %v142 = vadd.f32 %v105, %v141
  %v143 = vpop.f32.mrf.mxu0
  %144 = vdwg.mxu0
  %v145 = vpack.c.bf16 %v142, %v142
  %v146 = vld [vmem:[%s2] sm:$0xf]
  %v147 = vld [vmem:[%s3] sm:$0xf]
  %v148 = vld [vmem:[%s1] sm:$0x3]
  %150 = vst [vmem:[#allocation1] ss:$4 sm:$0xff] %v148
  %v151 = vld.sshfl [vmem:[#allocation1] sm:$0xff pattern:$0x73625140]
  %153 = vrot.lane.b32.xlu0 %v151, 124
  %v154 = vpop.permute.xlu0 %153
  %155 = vst [vmem:[#allocation1] ss:$4 sm:$0xff] %v148
  %v156 = vld.sshfl [vmem:[#allocation1] sm:$0xff pattern:$0x73625140]
  %158 = vrot.lane.b32.xlu0 %v156, 126
  %v159 = vpop.permute.xlu0 %158
  %160 = vst [vmem:[#allocation1] ss:$4 sm:$0xff] %v148
  %v161 = vld.sshfl [vmem:[#allocation1] sm:$0xff pattern:$0x73625140]
  %163 = vrot.lane.b32.xlu0 %v161, 2
  %v164 = vpop.permute.xlu0 %163
  %165 = vst [vmem:[#allocation1] ss:$4 sm:$0xff] %v148
  %v166 = vld.sshfl [vmem:[#allocation1] sm:$0xff pattern:$0x73625140]
  %168 = vrot.lane.b32.xlu0 %v166, 4
  %v169 = vpop.permute.xlu0 %168
  %170 = vst [vmem:[#allocation1] ss:$4 sm:$0xff] %v148
  %v171 = vld.sshfl [vmem:[#allocation1] sm:$0xff pattern:$0x73625140]
  %173 = vrot.lane.b32.xlu0 %v171, 6
  %v174 = vpop.permute.xlu0 %173
  %175 = vst [vmem:[#allocation1] ss:$4 sm:$0xff] %v148
  %v176 = vld.sshfl [vmem:[#allocation1] sm:$0xff pattern:$0x73625140]
  %178 = vrot.lane.b32.xlu0 %v176, 8
  %v179 = vpop.permute.xlu0 %178
  %180 = vst [vmem:[#allocation1] ss:$4 sm:$0xff] %v148
  %v181 = vld.sshfl [vmem:[#allocation1] sm:$0xff pattern:$0x73625140]
  %183 = vrot.lane.b32.xlu0 %v181, 10
  %v184 = vpop.permute.xlu0 %183
  %185 = vst [vmem:[#allocation1] ss:$4 sm:$0xff] %v148
  %v186 = vld.sshfl [vmem:[#allocation1] sm:$0xff pattern:$0x73625140]
  %188 = vrot.lane.b32.xlu0 %v186, 12
  %v189 = vpop.permute.xlu0 %188
  %vm190 = vcmask 7168
  %v193 = vsel %vm190, %v154, %v159
  %vm194 = vcmask 15360
  %v195 = vsel %vm194, %v193, %v148
  %vm196 = vcmask 23552
  %v198 = vsel %vm196, %v195, %v164
  %vm199 = vcmask 31744
  %v201 = vsel %vm199, %v198, %v169
  %vm202 = vcmask 162816
  %v204 = vsel %vm202, %v201, %v174
  %vm205 = vcmask 171008
  %v207 = vsel %vm205, %v204, %v179
  %vm208 = vcmask 179200
  %v210 = vsel %vm208, %v207, %v184
  %vm211 = vcmask 187392
  %v213 = vsel %vm211, %v210, %v189
  %vm214 = vcmask 64512
  %v216 = vsel %vm214, %v145, 0
  %v219 = vsel %vm68, %v147, 0
  %221 = vmatpush.bf16.msra.mxu0 0
  %222 = vmatpush.bf16.msra.mxu0 0
  %223 = vmatpush.bf16.msra.mxu0 0
  %224 = vmatpush.bf16.msra.mxu0 0
  %225 = vmatpush.bf16.msra.mxu0 0
  %226 = vmatpush.bf16.msra.mxu0 0
  %227 = vmatpush.bf16.msra.mxu0 0
  %228 = vmatpush.bf16.msra.mxu0 %v219
  %229 = vmatmul.bf16.gmra.mxu0 %v216
  %v230 = vpop.f32.mrf.mxu0
  %v231 = vadd.f32 0.0, %v230
  %v232 = vpop.f32.mrf.mxu0
  %233 = vdwg.mxu0
  %v235 = vsel %vm214, %v124, 0
  %v238 = vsel %vm68, %v146, 0
  %240 = vmatpush.bf16.msra.mxu0 0
  %241 = vmatpush.bf16.msra.mxu0 0
  %242 = vmatpush.bf16.msra.mxu0 0
  %243 = vmatpush.bf16.msra.mxu0 0
  %244 = vmatpush.bf16.msra.mxu0 0
  %245 = vmatpush.bf16.msra.mxu0 0
  %246 = vmatpush.bf16.msra.mxu0 0
  %247 = vmatpush.bf16.msra.mxu0 %v238
  %248 = vmatmul.bf16.gmra.mxu0 %v235
  %v249 = vpop.f32.mrf.mxu0
  %v250 = vadd.f32 %v231, %v249
  %v251 = vpop.f32.mrf.mxu0
  %252 = vdwg.mxu0
  %v253 = vpack.c.bf16 %v250, %v250
  %v255 = vunpack.c.l.b16 %v253
  %v256 = vpack.c.b16 %v255, %v255
  %v257 = vrot.slane %v256, 6
  %v259 = vsel %vm65, %v213, %v257
  %s260 = scalar_lea.vmem %s1, 2
  %v261 = vld [vmem:[%s260] sm:$0x3]
  %263 = vst [vmem:[#allocation1] ss:$4 sm:$0xff] %v261
  %v264 = vld.sshfl [vmem:[#allocation1] sm:$0xff pattern:$0x73625140]
  %266 = vrot.lane.b32.xlu0 %v264, 124
  %v267 = vpop.permute.xlu0 %266
  %268 = vst [vmem:[#allocation1] ss:$4 sm:$0xff] %v261
  %v269 = vld.sshfl [vmem:[#allocation1] sm:$0xff pattern:$0x73625140]
  %271 = vrot.lane.b32.xlu0 %v269, 126
  %v272 = vpop.permute.xlu0 %271
  %273 = vst [vmem:[#allocation1] ss:$4 sm:$0xff] %v261
  %v274 = vld.sshfl [vmem:[#allocation1] sm:$0xff pattern:$0x73625140]
  %276 = vrot.lane.b32.xlu0 %v274, 2
  %v277 = vpop.permute.xlu0 %276
  %278 = vst [vmem:[#allocation1] ss:$4 sm:$0xff] %v261
  %v279 = vld.sshfl [vmem:[#allocation1] sm:$0xff pattern:$0x73625140]
  %281 = vrot.lane.b32.xlu0 %v279, 4
  %v282 = vpop.permute.xlu0 %281
  %283 = vst [vmem:[#allocation1] ss:$4 sm:$0xff] %v261
  %v284 = vld.sshfl [vmem:[#allocation1] sm:$0xff pattern:$0x73625140]
  %286 = vrot.lane.b32.xlu0 %v284, 6
  %v287 = vpop.permute.xlu0 %286
  %288 = vst [vmem:[#allocation1] ss:$4 sm:$0xff] %v261
  %v289 = vld.sshfl [vmem:[#allocation1] sm:$0xff pattern:$0x73625140]
  %291 = vrot.lane.b32.xlu0 %v289, 8
  %v292 = vpop.permute.xlu0 %291
  %293 = vst [vmem:[#allocation1] ss:$4 sm:$0xff] %v261
  %v294 = vld.sshfl [vmem:[#allocation1] sm:$0xff pattern:$0x73625140]
  %296 = vrot.lane.b32.xlu0 %v294, 10
  %v297 = vpop.permute.xlu0 %296
  %298 = vst [vmem:[#allocation1] ss:$4 sm:$0xff] %v261
  %v299 = vld.sshfl [vmem:[#allocation1] sm:$0xff pattern:$0x73625140]
  %301 = vrot.lane.b32.xlu0 %v299, 12
  %v302 = vpop.permute.xlu0 %301
  %v305 = vsel %vm190, %v267, %v272
  %v306 = vsel %vm194, %v305, %v261
  %v308 = vsel %vm196, %v306, %v277
  %v310 = vsel %vm199, %v308, %v282
  %v312 = vsel %vm202, %v310, %v287
  %v314 = vsel %vm205, %v312, %v292
  %v316 = vsel %vm208, %v314, %v297
  %v318 = vsel %vm211, %v316, %v302
  %v320 = vunpack.c.l.b16 %v145
  %v321 = vpack.c.b16 %v320, %v320
  %322 = vrot.lane.b32.xlu0 %v321, 116
  %v323 = vpop.permute.xlu0 %322
  %v325 = vsel %vm214, %v323, 0
  %327 = vmatpush.bf16.msra.mxu0 0
  %328 = vmatpush.bf16.msra.mxu0 0
  %329 = vmatpush.bf16.msra.mxu0 0
  %330 = vmatpush.bf16.msra.mxu0 0
  %331 = vmatpush.bf16.msra.mxu0 0
  %332 = vmatpush.bf16.msra.mxu0 0
  %333 = vmatpush.bf16.msra.mxu0 0
  %334 = vmatpush.bf16.msra.mxu0 %v219
  %335 = vmatmul.bf16.gmra.mxu0 %v325
  %v336 = vpop.f32.mrf.mxu0
  %v337 = vadd.f32 0.0, %v336
  %v338 = vpop.f32.mrf.mxu0
  %339 = vdwg.mxu0
  %v341 = vunpack.c.l.b16 %v124
  %v342 = vpack.c.b16 %v341, %v341
  %343 = vrot.lane.b32.xlu0 %v342, 116
  %v344 = vpop.permute.xlu0 %343
  %v346 = vsel %vm214, %v344, 0
  %348 = vmatpush.bf16.msra.mxu0 0
  %349 = vmatpush.bf16.msra.mxu0 0
  %350 = vmatpush.bf16.msra.mxu0 0
  %351 = vmatpush.bf16.msra.mxu0 0
  %352 = vmatpush.bf16.msra.mxu0 0
  %353 = vmatpush.bf16.msra.mxu0 0
  %354 = vmatpush.bf16.msra.mxu0 0
  %355 = vmatpush.bf16.msra.mxu0 %v238
  %356 = vmatmul.bf16.gmra.mxu0 %v346
  %v357 = vpop.f32.mrf.mxu0
  %v358 = vadd.f32 %v337, %v357
  %v359 = vpop.f32.mrf.mxu0
  %360 = vdwg.mxu0
  %v361 = vpack.c.bf16 %v358, %v358
  %v363 = vunpack.c.l.b16 %v361
  %v364 = vpack.c.b16 %v363, %v363
  %v365 = vrot.slane %v364, 6
  %v367 = vsel %vm65, %v318, %v365
  %369 = vrot.lane.b32.xlu0 %v367, 24
  %v370 = vpop.permute.xlu0 %369
  %vm371 = vcmask 195584
  %v373 = vsel %vm371, %v259, %v370
  %vm374 = vcmask 392192
  %v376 = vsel %vm374, %v373, 0
  %v377 = vld [vmem:[%s7] sm:$0xf]
  %v378 = vld [vmem:[%s8] sm:$0xff]
  %v379 = vld [vmem:[%s9] sm:$0xff]
  %v381 = vrot.slane %v376, 4
  %382 = vrot.lane.b32.xlu0 %v381, 127
  %v383 = vpop.permute.xlu0 %382
  %384 = vrot.lane.b32.xlu0 %v376, 126
  %v385 = vpop.permute.xlu0 %384
  %386 = vrot.lane.b32.xlu0 %v381, 125
  %v387 = vpop.permute.xlu0 %386
  %388 = vrot.lane.b32.xlu0 %v376, 124
  %v389 = vpop.permute.xlu0 %388
  %390 = vrot.lane.b32.xlu0 %v381, 123
  %v391 = vpop.permute.xlu0 %390
  %392 = vrot.lane.b32.xlu0 %v376, 122
  %v393 = vpop.permute.xlu0 %392
  %394 = vrot.lane.b32.xlu0 %v381, 121
  %v395 = vpop.permute.xlu0 %394
  %396 = vrot.lane.b32.xlu0 %v376, 120
  %v397 = vpop.permute.xlu0 %396
  %v399 = vsel %vm68, %v376, %v383
  %v403 = vsel %vm68, %v385, %v387
  %v407 = vsel %vm68, %v389, %v391
  %v411 = vsel %vm68, %v393, %v395
  %vm413 = vcmask 588800
  %v415 = vsel %vm413, %v377, 0
  %v418 = vsel %vm68, %v397, 0
  %420 = vmatpush.bf16.msra.mxu0 0
  %421 = vmatpush.bf16.msra.mxu0 0
  %422 = vmatpush.bf16.msra.mxu0 0
  %423 = vmatpush.bf16.msra.mxu0 %v418
  %424 = vmatpush.bf16.msra.mxu0 %v411
  %425 = vmatpush.bf16.msra.mxu0 %v407
  %426 = vmatpush.bf16.msra.mxu0 %v403
  %427 = vmatpush.bf16.msra.mxu0 %v399
  %428 = vmatmul.bf16.gmra.mxu0 %v415
  %v429 = vpop.f32.mrf.mxu0
  %v430 = vadd.f32 0.0, %v429
  %v431 = vpop.f32.mrf.mxu0
  %432 = vdwg.mxu0
  %434 = vrot.lane.b32.xlu0 %v430, 120
  %v435 = vpop.permute.xlu0 %434
  %v437 = vsel %vm107, %v430, %v435
  %vm438 = vcmask 261120
  %v439 = vsel %vm438, %v437, 0.0
  %440 = vadd.xlane.f32.xlu0 %v439
  %v441 = vpop.xlane.xlu0 %440
  %v442 = vmul.f32 %v437, %v437
  %v443 = vsel %vm438, %v442, 0.0
  %444 = vadd.xlane.f32.xlu0 %v443
  %v445 = vpop.xlane.xlu0 %444
  %v446 = vrcp.pop 32.0
  %v447 = vmul.f32 32.0, %v446
  %v448 = vsub.f32 1.0, %v447
  %v449 = vmul.f32 %v446, %v448
  %v450 = vadd.f32 %v446, %v449
  %vm451 = vweird.f32 %v446
  %v452 = vsel %vm451, %v446, %v450
  %v453 = vmul.f32 %v441, %v452
  %v454 = vmul.f32 %v445, %v452
  %v455 = vmul.f32 %v453, %v453
  %v456 = vsub.f32 %v454, %v455
  %v457 = vadd.f32 %v456, 1e-05
  %v458 = vrsqrt.pop %v457
  %v459 = vmul.f32 %v458, %v457
  %v460 = vmul.f32 %v459, %v458
  %v461 = vmul.f32 0.5, %v460
  %v462 = vsub.f32 1.5, %v461
  %v463 = vmul.f32 %v458, %v462
  %vm464 = vweird.f32 %v457
  %vm465 = vweird.f32 %v458
  %vm466 = vmor %vm464, %vm465
  %v467 = vsel %vm466, %v458, %v463
  %v468 = vmul.f32 %v378, %v467
  %470 = vset.pattern.permute.xlu0 0
  %471 = vperm.xlu0 %470, %v468
  %v472 = vpop.permute.xlu0 %471
  %v474 = vmul.f32 %v437, %v472
  %v475 = vmul.f32 %v453, %v468
  %v476 = vsub.f32 %v379, %v475
  %478 = vset.pattern.permute.xlu0 0
  %479 = vperm.xlu0 %478, %v476
  %v480 = vpop.permute.xlu0 %479
  %v482 = vadd.f32 %v474, %v480
  %v483 = vmax.f32 %v482, 0.0
  %v484 = vpack.c.bf16 %v483, %v483
  %v486 = vunpack.c.l.b16 %v484
  %v487 = vpack.c.b16 %v486, %v486
  %488 = vrot.lane.b32.xlu0 %v487, 124
  %v489 = vpop.permute.xlu0 %488
  %490 = vrot.lane.b32.xlu0 %v487, 126
  %v491 = vpop.permute.xlu0 %490
  %492 = vrot.lane.b32.xlu0 %v487, 2
  %v493 = vpop.permute.xlu0 %492
  %494 = vrot.lane.b32.xlu0 %v487, 4
  %v495 = vpop.permute.xlu0 %494
  %496 = vrot.lane.b32.xlu0 %v487, 6
  %v497 = vpop.permute.xlu0 %496
  %498 = vrot.lane.b32.xlu0 %v487, 8
  %v499 = vpop.permute.xlu0 %498
  %500 = vrot.lane.b32.xlu0 %v487, 10
  %v501 = vpop.permute.xlu0 %500
  %502 = vrot.lane.b32.xlu0 %v487, 12
  %v503 = vpop.permute.xlu0 %502
  %v506 = vsel %vm190, %v489, %v491
  %v508 = vsel %vm194, %v506, %v484
  %v510 = vsel %vm196, %v508, %v493
  %v512 = vsel %vm199, %v510, %v495
  %v514 = vsel %vm202, %v512, %v497
  %v516 = vsel %vm205, %v514, %v499
  %v518 = vsel %vm208, %v516, %v501
  %v520 = vsel %vm211, %v518, %v503
  %521 = vrot.lane.b32.xlu0 %v487, 108
  %v522 = vpop.permute.xlu0 %521
  %523 = vrot.lane.b32.xlu0 %v487, 110
  %v524 = vpop.permute.xlu0 %523
  %525 = vrot.lane.b32.xlu0 %v487, 112
  %v526 = vpop.permute.xlu0 %525
  %527 = vrot.lane.b32.xlu0 %v487, 114
  %v528 = vpop.permute.xlu0 %527
  %529 = vrot.lane.b32.xlu0 %v487, 116
  %v530 = vpop.permute.xlu0 %529
  %531 = vrot.lane.b32.xlu0 %v487, 118
  %v532 = vpop.permute.xlu0 %531
  %533 = vrot.lane.b32.xlu0 %v487, 120
  %v534 = vpop.permute.xlu0 %533
  %535 = vrot.lane.b32.xlu0 %v487, 122
  %v536 = vpop.permute.xlu0 %535
  %v539 = vsel %vm190, %v522, %v524
  %v541 = vsel %vm194, %v539, %v526
  %v543 = vsel %vm196, %v541, %v528
  %v545 = vsel %vm199, %v543, %v530
  %v547 = vsel %vm202, %v545, %v532
  %v549 = vsel %vm205, %v547, %v534
  %v551 = vsel %vm208, %v549, %v536
  %v552 = vsel %vm211, %v551, %v489
  %554 = vrot.lane.b32.xlu0 %v552, 24
  %v555 = vpop.permute.xlu0 %554
  %v557 = vsel %vm371, %v520, %v555
  %v558 = vsel %vm374, %v557, 0
  %v559 = vld [vmem:[%s10] sm:$0xf]
  %v560 = vld [vmem:[%s11] sm:$0xff]
  %v561 = vld [vmem:[%s12] sm:$0xff]
  %v563 = vrot.slane %v558, 4
  %564 = vrot.lane.b32.xlu0 %v563, 127
  %v565 = vpop.permute.xlu0 %564
  %566 = vrot.lane.b32.xlu0 %v558, 126
  %v567 = vpop.permute.xlu0 %566
  %568 = vrot.lane.b32.xlu0 %v563, 125
  %v569 = vpop.permute.xlu0 %568
  %570 = vrot.lane.b32.xlu0 %v558, 124
  %v571 = vpop.permute.xlu0 %570
  %572 = vrot.lane.b32.xlu0 %v563, 123
  %v573 = vpop.permute.xlu0 %572
  %574 = vrot.lane.b32.xlu0 %v558, 122
  %v575 = vpop.permute.xlu0 %574
  %576 = vrot.lane.b32.xlu0 %v563, 121
  %v577 = vpop.permute.xlu0 %576
  %578 = vrot.lane.b32.xlu0 %v558, 120
  %v579 = vpop.permute.xlu0 %578
  %v581 = vsel %vm68, %v558, %v565
  %v585 = vsel %vm68, %v567, %v569
  %v589 = vsel %vm68, %v571, %v573
  %v593 = vsel %vm68, %v575, %v577
  %v596 = vsel %vm413, %v559, 0
  %v599 = vsel %vm68, %v579, 0
  %601 = vmatpush.bf16.msra.mxu0 0
  %602 = vmatpush.bf16.msra.mxu0 0
  %603 = vmatpush.bf16.msra.mxu0 0
  %604 = vmatpush.bf16.msra.mxu0 %v599
  %605 = vmatpush.bf16.msra.mxu0 %v593
  %606 = vmatpush.bf16.msra.mxu0 %v589
  %607 = vmatpush.bf16.msra.mxu0 %v585
  %608 = vmatpush.bf16.msra.mxu0 %v581
  %609 = vmatmul.bf16.gmra.mxu0 %v596
  %v610 = vpop.f32.mrf.mxu0
  %v611 = vadd.f32 0.0, %v610
  %v612 = vpop.f32.mrf.mxu0
  %613 = vdwg.mxu0
  %615 = vrot.lane.b32.xlu0 %v611, 120
  %v616 = vpop.permute.xlu0 %615
  %v618 = vsel %vm107, %v611, %v616
  %v619 = vsel %vm438, %v618, 0.0
  %620 = vadd.xlane.f32.xlu0 %v619
  %v621 = vpop.xlane.xlu0 %620
  %v622 = vmul.f32 %v618, %v618
  %v623 = vsel %vm438, %v622, 0.0
  %624 = vadd.xlane.f32.xlu0 %v623
  %v625 = vpop.xlane.xlu0 %624
  %v626 = vmul.f32 %v621, %v452
  %v627 = vmul.f32 %v625, %v452
  %v628 = vmul.f32 %v626, %v626
  %v629 = vsub.f32 %v627, %v628
  %v630 = vadd.f32 %v629, 1e-05
  %v631 = vrsqrt.pop %v630
  %v632 = vmul.f32 %v631, %v630
  %v633 = vmul.f32 %v632, %v631
  %v634 = vmul.f32 0.5, %v633
  %v635 = vsub.f32 1.5, %v634
  %v636 = vmul.f32 %v631, %v635
  %vm637 = vweird.f32 %v630
  %vm638 = vweird.f32 %v631
  %vm639 = vmor %vm637, %vm638
  %v640 = vsel %vm639, %v631, %v636
  %v641 = vmul.f32 %v560, %v640
  %643 = vset.pattern.permute.xlu0 0
  %644 = vperm.xlu0 %643, %v641
  %v645 = vpop.permute.xlu0 %644
  %v647 = vmul.f32 %v618, %v645
  %v648 = vmul.f32 %v626, %v641
  %v649 = vsub.f32 %v561, %v648
  %651 = vset.pattern.permute.xlu0 0
  %652 = vperm.xlu0 %651, %v649
  %v653 = vpop.permute.xlu0 %652
  %v655 = vadd.f32 %v647, %v653
  %v656 = vmax.f32 %v655, 0.0
  %657 = vst.msk [vmem:[%s13] sm:$0xff] %vm438, %v656
  // Predicated region
  $region54: #{unet_up_forward.1} parent=0 // pred_check
    _
  $region55: #{unet_up_forward.1} parent=0 // pred_check_branch
    %659 = sbr.rel (0) target = $region57
  $region56: #{unet_up_forward.1} parent=0 // pred_region
    _
  $region57: #{unet_up_forward.1} parent=0 // pred_fallthru
    _
  // Predicated region
  $region58: #{unet_up_forward.1} parent=0 // pred_check
    _
  $region59: #{unet_up_forward.1} parent=0 // pred_check_branch
    %661 = sbr.rel (0) target = $region61
  $region60: #{unet_up_forward.1} parent=0 // pred_region
    _
  $region61: #{unet_up_forward.1} parent=0 // pred_fallthru
    _

</llo_original>
